<compile_context>
chip_gen: v7x
topology: tpu7x:2x2x1
jax: 0.10.0
libtpu: 0.0.40
codegen_flags: <defaults>
</compile_context>

<pallas_src>
import jax
import jax.numpy as jnp
from jax import lax
from jax.experimental import pallas as pl
from jax.experimental.pallas import tpu as pltpu

_IN_FEATURES = 63
_OUT_FEATURES = 63
_TB_MAX = 8192  # rows per batch tile; safe for scoped VMEM on v5e/v6e/v7x


def _linear_kernel(x_ref, w_ref, b_ref, o_ref):
    # x_ref: (TB, 63)  w_ref: (63, 63) PyTorch layout [out, in]  b_ref: (1, 63)
    x = x_ref[...]
    w = w_ref[...]
    # Contract x's feature axis (1) with w's `in` axis (1): y = x @ w.T on the
    # MXU, without materializing a weight transpose in the wrapper.
    y = lax.dot_general(
        x, w,
        dimension_numbers=(((1,), (1,)), ((), ())),
        preferred_element_type=jnp.float32,
    )
    o_ref[...] = (y + b_ref[...]).astype(o_ref.dtype)


def _round_up(n, m):
    return ((n + m - 1) // m) * m


def dummy_model_forward(pose_batch, weight, bias):
    """DummyModel.forward: Linear(63, 63) on flattened poses.

    pose_batch: (..., 21, 3) float32
    weight:     (63, 63) float32, PyTorch layout [out_features, in_features]
    bias:       (63,)   float32
    returns:    (-1, 21, 3) float32
    """
    x = pose_batch.reshape(-1, _IN_FEATURES)      # glue reshape in plain JAX
    B = x.shape[0]

    # 8-row-aligned tile; small batches collapse to a single tile. The last
    # (ragged) tile relies on Pallas write masking — safe because compute is
    # purely row-wise.
    TB = min(_TB_MAX, _round_up(B, 8))
    grid = (pl.cdiv(B, TB),)
    b2 = bias.reshape(1, _OUT_FEATURES)

    y = pl.pallas_call(
        _linear_kernel,
        out_shape=jax.ShapeDtypeStruct((B, _OUT_FEATURES), jnp.float32),
        grid=grid,
        in_specs=[
            pl.BlockSpec((TB, _IN_FEATURES), lambda i: (i, 0)),
            pl.BlockSpec((_OUT_FEATURES, _IN_FEATURES), lambda i: (0, 0)),
            pl.BlockSpec((1, _OUT_FEATURES), lambda i: (0, 0)),
        ],
        out_specs=pl.BlockSpec((TB, _OUT_FEATURES), lambda i: (i, 0)),
        compiler_params=pltpu.CompilerParams(
            # Batch tiles are independent -> megacore sharding on v7x.
            dimension_semantics=("parallel",),
        ),
    )(x, weight, b2)

    return y.reshape(-1, 21, 3)


def init_params(key):
    # Deterministic init mimicking nn.Linear default (uniform +/- 1/sqrt(fan_in)).
    k_w, k_b = jax.random.split(key)
    bound = 1.0 / jnp.sqrt(63.0)
    weight = jax.random.uniform(k_w, (_OUT_FEATURES, _IN_FEATURES),
                                jnp.float32, -bound, bound)
    bias = jax.random.uniform(k_b, (_OUT_FEATURES,), jnp.float32, -bound, bound)
    return weight, bias


if __name__ == "__main__":
    key = jax.random.PRNGKey(0)
    k_params, k_x1, k_x2 = jax.random.split(key, 3)
    weight, bias = init_params(k_params)

    # Small batch of poses: (2, 21, 3)
    pose_batch = jax.random.normal(k_x1, (2, 21, 3), jnp.float32)
    out = jax.block_until_ready(dummy_model_forward(pose_batch, weight, bias))
    ref = (pose_batch.reshape(-1, 63) @ weight.T + bias).reshape(-1, 21, 3)
    assert out.shape == (2, 21, 3), out.shape
    assert jnp.allclose(out, ref, atol=1e-5, rtol=1e-5)

    # Slightly larger, non-multiple-of-8 batch to exercise the ragged tile path.
    pose_batch2 = jax.random.normal(k_x2, (17, 21, 3), jnp.float32)
    out2 = jax.block_until_ready(dummy_model_forward(pose_batch2, weight, bias))
    ref2 = (pose_batch2.reshape(-1, 63) @ weight.T + bias).reshape(-1, 21, 3)
    assert out2.shape == (17, 21, 3), out2.shape
    assert jnp.allclose(out2, ref2, atol=1e-5, rtol=1e-5)

    print("KERNEL_OK")
</pallas_src>

<mosaic_0001>
module attributes {stable_mosaic.version = 11 : i64} {
  func.func @_linear_kernel(%arg0: i32, %arg1: memref<8x63xf32, #tpu.memory_space<vmem>>, %arg2: memref<63x63xf32, #tpu.memory_space<vmem>>, %arg3: memref<1x63xf32, #tpu.memory_space<vmem>>, %arg4: memref<8x63xf32, #tpu.memory_space<vmem>>) attributes {dimension_semantics = [#tpu.dimension_semantics<parallel>], iteration_bounds = array<i64: 1>, scalar_prefetch = 0 : i64, scratch_operands = 0 : i64, tpu.core_type = #tpu.core_type<tc>, window_params = [{transform_indices = @transform_0, window_bounds = array<i64: 8, 63>}, {pipeline_mode = #tpu.pipeline_mode<synchronous>, transform_indices = @transform_1, window_bounds = array<i64: 63, 63>}, {pipeline_mode = #tpu.pipeline_mode<synchronous>, transform_indices = @transform_2, window_bounds = array<i64: 1, 63>}, {transform_indices = @transform_3, window_bounds = array<i64: 8, 63>}]} {
    %c0 = arith.constant 0 : index
    %c0_0 = arith.constant 0 : index
    %0 = vector.load %arg1[%c0, %c0_0] : memref<8x63xf32, #tpu.memory_space<vmem>>, vector<8x63xf32>
    %c0_1 = arith.constant 0 : index
    %c0_2 = arith.constant 0 : index
    %1 = vector.load %arg2[%c0_1, %c0_2] : memref<63x63xf32, #tpu.memory_space<vmem>>, vector<63x63xf32>
    %cst = arith.constant dense<0.000000e+00> : vector<8x63xf32>
    %2 = tpu.matmul %0, %1, %cst {dimension_numbers = #tpu.dot_dimension_numbers<[1], [1], [0], [0], [0, 0, 1, 0], [], []>} : vector<8x63xf32>, vector<63x63xf32>, vector<8x63xf32> -> vector<8x63xf32>
    %c0_3 = arith.constant 0 : index
    %c0_4 = arith.constant 0 : index
    %3 = vector.load %arg3[%c0_3, %c0_4] : memref<1x63xf32, #tpu.memory_space<vmem>>, vector<1x63xf32>
    %4 = vector.broadcast %3 : vector<1x63xf32> to vector<8x63xf32>
    %5 = arith.addf %2, %4 : vector<8x63xf32>
    %c0_5 = arith.constant 0 : index
    %c0_6 = arith.constant 0 : index
    %6 = vector.load %arg4[%c0_5, %c0_6] : memref<8x63xf32, #tpu.memory_space<vmem>>, vector<8x63xf32>
    tpu.vector_store %arg4[%c0_5, %c0_6], %5 {strides = array<i32>} : memref<8x63xf32, #tpu.memory_space<vmem>>, vector<8x63xf32>,
    return
  }
  func.func @transform_0(%arg0: i32) -> (i32, i32) {
    %c0_i32 = arith.constant 0 : i32
    %c0_i32_0 = arith.constant 0 : i32
    return %arg0, %c0_i32 : i32, i32
  }
  func.func @transform_1(%arg0: i32) -> (i32, i32) {
    %c0_i32 = arith.constant 0 : i32
    %c0_i32_0 = arith.constant 0 : i32
    %c0_i32_1 = arith.constant 0 : i32
    return %c0_i32, %c0_i32_0 : i32, i32
  }
  func.func @transform_2(%arg0: i32) -> (i32, i32) {
    %c0_i32 = arith.constant 0 : i32
    %c0_i32_0 = arith.constant 0 : i32
    %c0_i32_1 = arith.constant 0 : i32
    return %c0_i32, %c0_i32_0 : i32, i32
  }
  func.func @transform_3(%arg0: i32) -> (i32, i32) {
    %c0_i32 = arith.constant 0 : i32
    %c0_i32_0 = arith.constant 0 : i32
    return %arg0, %c0_i32 : i32, i32
  }
}

</mosaic_0001>

<llo_original>
// kernel: tpu_custom_call.1
$region0: #{tpu_custom_call.1}
  #allocation0 [shape = 'u32[]', space=smem, size = 0x4, offset = 0x4, fixed_abs, tag = 'smem constant byte address 0x4 - core index']
  #allocation1 [shape = 'u32[144,128]{1,0:T(1,128)}', space=vmem, size = 0x12000, scoped, tag = 'internal scratch']
  %s0 = inlined_call_operand.hbm [shape: f32[2,63], index: 0, kind: input, shape index: {}]
  %s1 = inlined_call_operand.hbm [shape: f32[63,63], index: 1, kind: input, shape index: {}]
  %s2 = inlined_call_operand.vmem [shape: f32[1,63], index: 2, kind: input, shape index: {}]
  %s3 = inlined_call_operand.hbm [shape: f32[2,63], index: 3, kind: output, shape index: {}]
  %s4 = sld [smem:[#allocation0]]
  $region30: #{tpu_custom_call.1} parent=0
    _
  %s6 = ssub.s32 1, %s4
  %s7 = scalar_select 0, %s6, %s4
  $region1: #{tpu_custom_call.1} parent=0
    #allocation2 [shape = 'u8[4096]{0}', space=vmem, size = 0x1000, scoped, tag = 'input window, operand 0, single buffered']
    #allocation3 [shape = 's32[1]{0}', space=sflag, size = 0x4, scoped, tag = 'scoped memory for tpu_custom_call.1']
    #allocation4 [shape = 's32[1]{0}', space=sflag, size = 0x4, scoped, tag = 'scoped memory for tpu_custom_call.1']
    #allocation5 [shape = 'u8[32768]{0}', space=vmem, size = 0x8000, scoped, tag = 'input window, operand 1, single buffered']
    #allocation6 [shape = 's32[1]{0}', space=sflag, size = 0x4, scoped, tag = 'scoped memory for tpu_custom_call.1']
    #allocation7 [shape = 'u8[4096]{0}', space=vmem, size = 0x1000, scoped, tag = 'output window, operand 0, single buffered']
    %8 = vsyncpa [#allocation3], 0
    %9 = vsyncpa [#allocation6], 0
    %10 = vsyncpa [#allocation4], 0
    // Predicated region
    $region2: #{tpu_custom_call.1} parent=1 // pred_check
      _
    $region3: #{tpu_custom_call.1} parent=1 // pred_check_branch
      %12 = sbr.rel (0) target = $region5
    $region4: #{tpu_custom_call.1} parent=1 // pred_region
      %s14 = ssub.s32 128, 32
      %15 = vsyncadd [#allocation3], %s14
      %s16 = sshll.u32 [#allocation2], 4
      %s17 = int_to_ptr.vmem [resolvable:$true] %s16
      %22 = dma.hbm_to_vmem [thread:$0]  %s0, 32, %s17, [#allocation3], 32, 32, 2
    $region5: #{tpu_custom_call.1} parent=1 // pred_fallthru
      _
    // Predicated region
    $region6: #{tpu_custom_call.1} parent=1 // pred_check
      _
    $region7: #{tpu_custom_call.1} parent=1 // pred_check_branch
      %24 = sbr.rel (0) target = $region9
    $region8: #{tpu_custom_call.1} parent=1 // pred_region
      %s26 = ssub.s32 1024, 1024
      %27 = vsyncadd [#allocation6], %s26
      %s28 = sshll.u32 [#allocation5], 4
      %s29 = int_to_ptr.vmem [resolvable:$true] %s28
      %34 = dma.hbm_to_vmem [thread:$0]  %s1, 1024, %s29, [#allocation6], 128, 128, 8
    $region9: #{tpu_custom_call.1} parent=1 // pred_fallthru
      _
    // Predicated region
    $region10: #{tpu_custom_call.1} parent=1 // pred_check
      _
    $region11: #{tpu_custom_call.1} parent=1 // pred_check_branch
      %36 = sbr.rel (0) target = $region13
    $region12: #{tpu_custom_call.1} parent=1 // pred_region
      _
    $region13: #{tpu_custom_call.1} parent=1 // pred_fallthru
      _
    // Predicated region
    $region14: #{tpu_custom_call.1} parent=1 // pred_check
      _
    $region15: #{tpu_custom_call.1} parent=1 // pred_check_branch
      %38 = sbr.rel (0) target = $region17
    $region16: #{tpu_custom_call.1} parent=1 // pred_region
      %39 = dma.done [#allocation3], 128
    $region17: #{tpu_custom_call.1} parent=1 // pred_fallthru
      _
    // Predicated region
    $region18: #{tpu_custom_call.1} parent=1 // pred_check
      _
    $region19: #{tpu_custom_call.1} parent=1 // pred_check_branch
      %41 = sbr.rel (0) target = $region21
    $region20: #{tpu_custom_call.1} parent=1 // pred_region
      %42 = dma.done [#allocation6], 1024
    $region21: #{tpu_custom_call.1} parent=1 // pred_fallthru
      _
    %v43 = vld [vmem:[#allocation2] sm:$0xff]
    %v44 = vld [vmem:[#allocation5] sm:$0xff]
    %v45 = vld [vmem:[#allocation5 + $0x8] sm:$0xff]
    %v46 = vld [vmem:[#allocation5 + $0x10] sm:$0xff]
    %v47 = vld [vmem:[#allocation5 + $0x18] sm:$0xff]
    %v48 = vld [vmem:[#allocation5 + $0x20] sm:$0xff]
    %v49 = vld [vmem:[#allocation5 + $0x28] sm:$0xff]
    %v50 = vld [vmem:[#allocation5 + $0x30] sm:$0xff]
    %v51 = vld [vmem:[#allocation5 + $0x38] sm:$0x7f]
    %v52 = vld [vmem:[%s2] sm:$0x1]
    %v54 = vlaneseq
    %v55 = vshrl.u32 %v54, 7
    %v56 = vsub.s32 0, %v55
    %v57 = vrot.slane %v52, %v56
    %vm59 = vcmask 515072
    %v61 = vsel %vm59, %v43, 0
    %v64 = vsel %vm59, %v44, 0
    %v67 = vsel %vm59, %v45, 0
    %v70 = vsel %vm59, %v46, 0
    %v73 = vsel %vm59, %v47, 0
    %v76 = vsel %vm59, %v48, 0
    %v79 = vsel %vm59, %v49, 0
    %v82 = vsel %vm59, %v50, 0
    %v85 = vsel %vm59, %v51, 0
    %87 = vmatprep.subr.mxu0 0.0
    %88 = vmatpush1.xpose.msra.mxu0 %v64
    %89 = vmatprep.subr.mxu0 0.0
    %90 = vmatpush1.xpose.msra.mxu0 %v67
    %91 = vmatprep.subr.mxu0 0.0
    %92 = vmatpush1.xpose.msra.mxu0 %v70
    %93 = vmatprep.subr.mxu0 0.0
    %94 = vmatpush1.xpose.msra.mxu0 %v73
    %95 = vmatprep.subr.mxu0 0.0
    %96 = vmatpush1.xpose.msra.mxu0 %v76
    %97 = vmatprep.subr.mxu0 0.0
    %98 = vmatpush1.xpose.msra.mxu0 %v79
    %99 = vmatprep.subr.mxu0 0.0
    %100 = vmatpush1.xpose.msra.mxu0 %v82
    %101 = vmatprep.subr.mxu0 0.0
    %102 = vmatpush1.xpose.msra.mxu0 %v85
    %103 = vmatprep.subr.mxu0 0.0
    %104 = vmatpush1.xpose.msra.mxu0 0.0
    %105 = vmatprep.subr.mxu0 0.0
    %106 = vmatpush1.xpose.msra.mxu0 0.0
    %107 = vmatprep.subr.mxu0 0.0
    %108 = vmatpush1.xpose.msra.mxu0 0.0
    %109 = vmatprep.subr.mxu0 0.0
    %110 = vmatpush1.xpose.msra.mxu0 0.0
    %111 = vmatprep.subr.mxu0 0.0
    %112 = vmatpush1.xpose.msra.mxu0 0.0
    %113 = vmatprep.subr.mxu0 0.0
    %114 = vmatpush1.xpose.msra.mxu0 0.0
    %115 = vmatprep.subr.mxu0 0.0
    %116 = vmatpush1.xpose.msra.mxu0 0.0
    %117 = vmatprep.subr.mxu0 0.0
    %118 = vmatpush1.xpose.msra.mxu0 0.0
    %119 = vmatprep.subr.mxu0 0.0
    %120 = vmatpush1.xpose.msra.mxu0 0.0
    %121 = vmatprep.subr.mxu0 0.0
    %122 = vmatpush1.xpose.msra.mxu0 0.0
    %123 = vmatprep.subr.mxu0 0.0
    %124 = vmatpush1.xpose.msra.mxu0 0.0
    %125 = vmatprep.subr.mxu0 0.0
    %126 = vmatpush1.xpose.msra.mxu0 0.0
    %127 = vmatprep.subr.mxu0 0.0
    %128 = vmatpush1.xpose.msra.mxu0 0.0
    %129 = vmatprep.subr.mxu0 0.0
    %130 = vmatpush1.xpose.msra.mxu0 0.0
    %131 = vmatprep.subr.mxu0 0.0
    %132 = vmatpush1.xpose.msra.mxu0 0.0
    %133 = vmatprep.subr.mxu0 0.0
    %134 = vmatpush1.xpose.msra.mxu0 0.0
    %135 = vmatprep.subr.mxu0 0.0
    %136 = vmatpush1.xpose.msra.mxu0 0.0
    %137 = vmatprep.subr.mxu0 0.0
    %138 = vmatpush1.xpose.msra.mxu0 0.0
    %139 = vmatprep.subr.mxu0 0.0
    %140 = vmatpush1.xpose.msra.mxu0 0.0
    %141 = vmatprep.subr.mxu0 0.0
    %142 = vmatpush1.xpose.msra.mxu0 0.0
    %143 = vmatprep.subr.mxu0 0.0
    %144 = vmatpush1.xpose.msra.mxu0 0.0
    %145 = vmatprep.subr.mxu0 0.0
    %146 = vmatpush1.xpose.msra.mxu0 0.0
    %147 = vmatprep.subr.mxu0 0.0
    %148 = vmatpush1.xpose.msra.mxu0 0.0
    %149 = vmatprep.subr.mxu0 0.0
    %150 = vmatpush1.xpose.msra.mxu0 0.0
    %151 = vmatprep.mubr.f32.mxu0 0.0
    %152 = vmatmul.mubr.f32.gmra.mrb[0].mxu0 %v61
    %v153 = vpop.f32.mrb[0].mxu0
    %v154 = vadd.f32 %v57, %v153
    %v155 = vpop.f32.mrb[0].mxu0
    %156 = vdwg.mxu0
    %157 = vst.msk [vmem:[#allocation7] sm:$0xff] %vm59, %v154
    // Predicated region
    $region22: #{tpu_custom_call.1} parent=1 // pred_check
      _
    $region23: #{tpu_custom_call.1} parent=1 // pred_check_branch
      %159 = sbr.rel (0) target = $region25
    $region24: #{tpu_custom_call.1} parent=1 // pred_region
      %s161 = ssub.s32 128, 32
      %162 = vsyncadd [#allocation4], %s161
      %s163 = sshll.u32 [#allocation7], 4
      %s164 = int_to_ptr.vmem [resolvable:$true] %s163
      %169 = dma.vmem_to_hbm [thread:$0]  %s164, 32, %s3, [#allocation4], 32, 32, 2
    $region25: #{tpu_custom_call.1} parent=1 // pred_fallthru
      _
    // Predicated region
    $region26: #{tpu_custom_call.1} parent=1 // pred_check
      _
    $region27: #{tpu_custom_call.1} parent=1 // pred_check_branch
      %171 = sbr.rel (0) target = $region29
    $region28: #{tpu_custom_call.1} parent=1 // pred_region
      %172 = dma.done [#allocation4], 128
    $region29: #{tpu_custom_call.1} parent=1 // pred_fallthru
      _
    %173 = vsyncpa [#allocation3], 1
    %174 = vsyncpa [#allocation6], 1
    %175 = vsyncpa [#allocation4], 1

</llo_original>
